<compile_context>
chip_gen: v7x
topology: tpu7x:2x2x1
jax: 0.10.0
libtpu: 0.0.40
codegen_flags: <defaults>
</compile_context>

<pallas_src>
import jax
import jax.numpy as jnp
from jax.experimental import pallas as pl
from jax.experimental.pallas import tpu as pltpu


def _round_up(x, m):
    return ((x + m - 1) // m) * m


def _reward_mlp_kernel(s_ref, a_ref, w1s_ref, w1a_ref, w2_ref, misc_ref, b3_ref,
                       o_ref):
    """One batch tile of the reward MLP.

    s_ref:   [TN, F_s]   state rows for this tile
    a_ref:   [TN, F_a]   action rows for this tile
    w1s_ref: [F_s, H]    first-layer weight rows acting on the state features
    w1a_ref: [F_a, H]    first-layer weight rows acting on the action features
    w2_ref:  [H, H]
    misc_ref:[3, H]      rows = (b1, b2, w3^T)   (packed to cut DMA count)
    b3_ref:  [1, 1]      scalar bias, lives in SMEM
    o_ref:   [TN, 1]
    """
    b1 = misc_ref[0:1, :]
    b2 = misc_ref[1:2, :]
    w3 = misc_ref[2:3, :]

    # Layer 1: fused "concat" -> two split-weight matmuls (no [s, a] materialization).
    h1 = jnp.dot(s_ref[...], w1s_ref[...], preferred_element_type=jnp.float32)
    h1 = h1 + jnp.dot(a_ref[...], w1a_ref[...], preferred_element_type=jnp.float32)
    h1 = jnp.maximum(h1 + b1, 0.0)

    # Layer 2 (MXU).
    h2 = jnp.dot(h1, w2_ref[...], preferred_element_type=jnp.float32)
    h2 = jnp.maximum(h2 + b2, 0.0)

    # Layer 3: [H, 1] projection as per-lane multiply + cross-lane reduction
    # (uses otherwise-idle VPU/XLU slots instead of a <1%-utilized MXU pass).
    out = jnp.sum(h2 * w3, axis=-1, keepdims=True) + b3_ref[0, 0]
    o_ref[...] = out.astype(o_ref.dtype)


def init_params(key, n_features_state, n_features_action, hidden_size):
    """Synthetic init matching nn.Linear shapes (weights stored transposed so
    the math is x @ W)."""
    f_in = n_features_state + n_features_action
    k1, k2, k3 = jax.random.split(key, 3)
    scale1 = 1.0 / jnp.sqrt(f_in)
    scale2 = 1.0 / jnp.sqrt(hidden_size)
    return {
        "w1": jax.random.normal(k1, (f_in, hidden_size), jnp.float32) * scale1,
        "b1": jnp.zeros((1, hidden_size), jnp.float32),
        "w2": jax.random.normal(k2, (hidden_size, hidden_size), jnp.float32) * scale2,
        "b2": jnp.zeros((1, hidden_size), jnp.float32),
        "w3": jax.random.normal(k3, (hidden_size, 1), jnp.float32) * scale2,
        "b3": jnp.zeros((1, 1), jnp.float32),
    }


def prepare_params(params, n_features_state):
    """One-time repack of the nn.Linear-style params into the kernel layout
    (split W1, pack b1/b2/w3^T into one [3, H] array, b3 as a [1,1] SMEM scalar)."""
    w1 = params["w1"]
    h = w1.shape[1]
    misc = jnp.concatenate(
        [params["b1"].reshape(1, h),
         params["b2"].reshape(1, h),
         params["w3"].reshape(1, h)], axis=0).astype(jnp.float32)
    return {
        "w1_s": w1[:n_features_state, :].astype(jnp.float32),
        "w1_a": w1[n_features_state:, :].astype(jnp.float32),
        "w2": params["w2"].astype(jnp.float32),
        "misc": misc,
        "b3": params["b3"].reshape(1, 1).astype(jnp.float32),
    }


def reward_predictor_forward(s, a, packed, *, block_rows=512):
    """Equivalent of Reward_predictor.forward.

    Args:
      s: [N, n_features_state] (or [n_features_state])
      a: [N, n_features_action] (or [n_features_action])
      packed: output of prepare_params()
    Returns:
      estimated_reward: [N, 1] (or [1] for vector inputs), matching PyTorch.
    """
    squeeze = s.ndim == 1
    if squeeze:
        s = s[None, :]
        a = a[None, :]
    s = s.astype(jnp.float32)
    a = a.astype(jnp.float32)

    n, f_s = s.shape
    _, f_a = a.shape
    h = packed["w2"].shape[0]

    # Batch tile: big enough to amortize per-step overhead, trivially within
    # VMEM budget even on v7x (TN*F_in*4B << 1 MiB per buffer).
    tn = min(block_rows, _round_up(n, 8))
    grid = (pl.cdiv(n, tn),)

    out = pl.pallas_call(
        _reward_mlp_kernel,
        out_shape=jax.ShapeDtypeStruct((n, 1), jnp.float32),
        grid=grid,
        in_specs=[
            pl.BlockSpec((tn, f_s), lambda i: (i, 0)),           # s: tiled over batch
            pl.BlockSpec((tn, f_a), lambda i: (i, 0)),           # a: tiled over batch
            pl.BlockSpec((f_s, h), lambda i: (0, 0)),            # w1_s: VMEM-resident
            pl.BlockSpec((f_a, h), lambda i: (0, 0)),            # w1_a: VMEM-resident
            pl.BlockSpec((h, h), lambda i: (0, 0)),              # w2:   VMEM-resident
            pl.BlockSpec((3, h), lambda i: (0, 0)),              # b1/b2/w3 packed
            pl.BlockSpec(memory_space=pltpu.MemorySpace.SMEM),   # b3 scalar in SMEM
        ],
        out_specs=pl.BlockSpec((tn, 1), lambda i: (i, 0)),
        compiler_params=pltpu.CompilerParams(
            # Batch tiles are independent: shard across TensorCores on v7x.
            dimension_semantics=("parallel",),
        ),
    )(s, a, packed["w1_s"], packed["w1_a"], packed["w2"], packed["misc"],
      packed["b3"])

    if squeeze:
        out = out[0]
    return out


def _reference_forward(s, a, params):
    x = jnp.concatenate([s, a], axis=-1)
    h1 = jnp.maximum(x @ params["w1"] + params["b1"], 0.0)
    h2 = jnp.maximum(h1 @ params["w2"] + params["b2"], 0.0)
    return h2 @ params["w3"] + params["b3"]


if __name__ == "__main__":
    # Shapes consistent with the module's forward:
    # n_steps_per_update = 8, n_features_state = 4, n_features_action = 4,
    # hidden_size = 32.
    n_steps = 8
    n_features_state = 4
    n_features_action = 4
    hidden_size = 32

    key = jax.random.PRNGKey(0)
    kp, ks, ka, ks2, ka2 = jax.random.split(key, 5)

    params = init_params(kp, n_features_state, n_features_action, hidden_size)
    packed = prepare_params(params, n_features_state)

    # Small call (matches the module's per-update usage).
    s = jax.random.normal(ks, (n_steps, n_features_state), jnp.float32)
    a = jax.random.normal(ka, (n_steps, n_features_action), jnp.float32)
    est_reward = reward_predictor_forward(s, a, packed)
    jax.block_until_ready(est_reward)
    ref = _reference_forward(s, a, params)
    assert est_reward.shape == (n_steps, 1)
    assert jnp.allclose(est_reward, ref, atol=1e-5), "small-batch mismatch"

    # Larger, non-multiple-of-tile batch to exercise the grid / partial tiles
    # (this is how the call site should amortize fixed launch cost).
    n_big = 1037
    s_big = jax.random.normal(ks2, (n_big, n_features_state), jnp.float32)
    a_big = jax.random.normal(ka2, (n_big, n_features_action), jnp.float32)
    est_big = reward_predictor_forward(s_big, a_big, packed)
    jax.block_until_ready(est_big)
    ref_big = _reference_forward(s_big, a_big, params)
    assert est_big.shape == (n_big, 1)
    assert jnp.allclose(est_big, ref_big, atol=1e-5), "large-batch mismatch"

    # TODO(synk): optimizer (RMSprop), preference loss, and human-comparison
    # training utilities are host-side training glue, not part of forward().

    print("KERNEL_OK")
</pallas_src>

<mosaic_0001>
module attributes {stable_mosaic.version = 11 : i64} {
  func.func @_reward_mlp_kernel(%arg0: i32, %arg1: memref<8x4xf32, #tpu.memory_space<vmem>>, %arg2: memref<8x4xf32, #tpu.memory_space<vmem>>, %arg3: memref<4x32xf32, #tpu.memory_space<vmem>>, %arg4: memref<4x32xf32, #tpu.memory_space<vmem>>, %arg5: memref<32x32xf32, #tpu.memory_space<vmem>>, %arg6: memref<3x32xf32, #tpu.memory_space<vmem>>, %arg7: memref<1x1xf32, #tpu.memory_space<smem>>, %arg8: memref<8x1xf32, #tpu.memory_space<vmem>>) attributes {dimension_semantics = [#tpu.dimension_semantics<parallel>], iteration_bounds = array<i64: 1>, scalar_prefetch = 0 : i64, scratch_operands = 0 : i64, tpu.core_type = #tpu.core_type<tc>, window_params = [{transform_indices = @transform_0, window_bounds = array<i64: 8, 4>}, {transform_indices = @transform_1, window_bounds = array<i64: 8, 4>}, {pipeline_mode = #tpu.pipeline_mode<synchronous>, transform_indices = @transform_2, window_bounds = array<i64: 4, 32>}, {pipeline_mode = #tpu.pipeline_mode<synchronous>, transform_indices = @transform_3, window_bounds = array<i64: 4, 32>}, {pipeline_mode = #tpu.pipeline_mode<synchronous>, transform_indices = @transform_4, window_bounds = array<i64: 32, 32>}, {pipeline_mode = #tpu.pipeline_mode<synchronous>, transform_indices = @transform_5, window_bounds = array<i64: 3, 32>}, {transform_indices = @transform_6, window_bounds = array<i64: 1, 1>}, {transform_indices = @transform_7, window_bounds = array<i64: 8, 1>}]} {
    %c0 = arith.constant 0 : index
    %c0_0 = arith.constant 0 : index
    %0 = vector.load %arg6[%c0, %c0_0] : memref<3x32xf32, #tpu.memory_space<vmem>>, vector<1x32xf32>
    %c1 = arith.constant 1 : index
    %c0_1 = arith.constant 0 : index
    %1 = vector.load %arg6[%c1, %c0_1] : memref<3x32xf32, #tpu.memory_space<vmem>>, vector<1x32xf32>
    %c2 = arith.constant 2 : index
    %c0_2 = arith.constant 0 : index
    %2 = vector.load %arg6[%c2, %c0_2] : memref<3x32xf32, #tpu.memory_space<vmem>>, vector<1x32xf32>
    %c0_3 = arith.constant 0 : index
    %c0_4 = arith.constant 0 : index
    %3 = vector.load %arg1[%c0_3, %c0_4] : memref<8x4xf32, #tpu.memory_space<vmem>>, vector<8x4xf32>
    %c0_5 = arith.constant 0 : index
    %c0_6 = arith.constant 0 : index
    %4 = vector.load %arg3[%c0_5, %c0_6] : memref<4x32xf32, #tpu.memory_space<vmem>>, vector<4x32xf32>
    %cst = arith.constant dense<0.000000e+00> : vector<8x32xf32>
    %5 = tpu.matmul %3, %4, %cst {dimension_numbers = #tpu.dot_dimension_numbers<[1], [0], [0], [1], [0, 0, 1, 1], [], []>} : vector<8x4xf32>, vector<4x32xf32>, vector<8x32xf32> -> vector<8x32xf32>
    %c0_7 = arith.constant 0 : index
    %c0_8 = arith.constant 0 : index
    %6 = vector.load %arg2[%c0_7, %c0_8] : memref<8x4xf32, #tpu.memory_space<vmem>>, vector<8x4xf32>
    %c0_9 = arith.constant 0 : index
    %c0_10 = arith.constant 0 : index
    %7 = vector.load %arg4[%c0_9, %c0_10] : memref<4x32xf32, #tpu.memory_space<vmem>>, vector<4x32xf32>
    %cst_11 = arith.constant dense<0.000000e+00> : vector<8x32xf32>
    %8 = tpu.matmul %6, %7, %cst_11 {dimension_numbers = #tpu.dot_dimension_numbers<[1], [0], [0], [1], [0, 0, 1, 1], [], []>} : vector<8x4xf32>, vector<4x32xf32>, vector<8x32xf32> -> vector<8x32xf32>
    %9 = arith.addf %5, %8 : vector<8x32xf32>
    %10 = vector.broadcast %0 : vector<1x32xf32> to vector<8x32xf32>
    %11 = arith.addf %9, %10 : vector<8x32xf32>
    %cst_12 = arith.constant 0.000000e+00 : f32
    %12 = vector.broadcast %cst_12 : f32 to vector<8x32xf32>
    %13 = arith.maximumf %11, %12 : vector<8x32xf32>
    %c0_13 = arith.constant 0 : index
    %c0_14 = arith.constant 0 : index
    %14 = vector.load %arg5[%c0_13, %c0_14] : memref<32x32xf32, #tpu.memory_space<vmem>>, vector<32x32xf32>
    %cst_15 = arith.constant dense<0.000000e+00> : vector<8x32xf32>
    %15 = tpu.matmul %13, %14, %cst_15 {dimension_numbers = #tpu.dot_dimension_numbers<[1], [0], [0], [1], [0, 0, 1, 1], [], []>} : vector<8x32xf32>, vector<32x32xf32>, vector<8x32xf32> -> vector<8x32xf32>
    %16 = vector.broadcast %1 : vector<1x32xf32> to vector<8x32xf32>
    %17 = arith.addf %15, %16 : vector<8x32xf32>
    %cst_16 = arith.constant 0.000000e+00 : f32
    %18 = vector.broadcast %cst_16 : f32 to vector<8x32xf32>
    %19 = arith.maximumf %17, %18 : vector<8x32xf32>
    %20 = vector.broadcast %2 : vector<1x32xf32> to vector<8x32xf32>
    %21 = arith.mulf %19, %20 : vector<8x32xf32>
    %cst_17 = arith.constant dense<0.000000e+00> : vector<8xf32>
    %22 = vector.multi_reduction <add>, %21, %cst_17 [1] : vector<8x32xf32> to vector<8xf32>
    %23 = vector.shape_cast %22 : vector<8xf32> to vector<8x1xf32>
    %c0_18 = arith.constant 0 : index
    %c0_19 = arith.constant 0 : index
    %24 = memref.load %arg7[%c0_18, %c0_19] : memref<1x1xf32, #tpu.memory_space<smem>>
    %25 = vector.broadcast %24 : f32 to vector<8x1xf32>
    %26 = arith.addf %23, %25 : vector<8x1xf32>
    %c0_20 = arith.constant 0 : index
    %c0_21 = arith.constant 0 : index
    %27 = vector.load %arg8[%c0_20, %c0_21] : memref<8x1xf32, #tpu.memory_space<vmem>>, vector<8x1xf32>
    tpu.vector_store %arg8[%c0_20, %c0_21], %26 {strides = array<i32>} : memref<8x1xf32, #tpu.memory_space<vmem>>, vector<8x1xf32>,
    return
  }
  func.func @transform_0(%arg0: i32) -> (i32, i32) {
    %c0_i32 = arith.constant 0 : i32
    %c0_i32_0 = arith.constant 0 : i32
    return %arg0, %c0_i32 : i32, i32
  }
  func.func @transform_1(%arg0: i32) -> (i32, i32) {
    %c0_i32 = arith.constant 0 : i32
    %c0_i32_0 = arith.constant 0 : i32
    return %arg0, %c0_i32 : i32, i32
  }
  func.func @transform_2(%arg0: i32) -> (i32, i32) {
    %c0_i32 = arith.constant 0 : i32
    %c0_i32_0 = arith.constant 0 : i32
    %c0_i32_1 = arith.constant 0 : i32
    return %c0_i32, %c0_i32_0 : i32, i32
  }
  func.func @transform_3(%arg0: i32) -> (i32, i32) {
    %c0_i32 = arith.constant 0 : i32
    %c0_i32_0 = arith.constant 0 : i32
    %c0_i32_1 = arith.constant 0 : i32
    return %c0_i32, %c0_i32_0 : i32, i32
  }
  func.func @transform_4(%arg0: i32) -> (i32, i32) {
    %c0_i32 = arith.constant 0 : i32
    %c0_i32_0 = arith.constant 0 : i32
    %c0_i32_1 = arith.constant 0 : i32
    return %c0_i32, %c0_i32_0 : i32, i32
  }
  func.func @transform_5(%arg0: i32) -> (i32, i32) {
    %c0_i32 = arith.constant 0 : i32
    %c0_i32_0 = arith.constant 0 : i32
    %c0_i32_1 = arith.constant 0 : i32
    return %c0_i32, %c0_i32_0 : i32, i32
  }
  func.func @transform_6(%arg0: i32) -> (i32, i32) {
    %c0_i32 = arith.constant 0 : i32
    %c0_i32_0 = arith.constant 0 : i32
    %c0_i32_1 = arith.constant 0 : i32
    return %c0_i32, %c0_i32_0 : i32, i32
  }
  func.func @transform_7(%arg0: i32) -> (i32, i32) {
    %c0_i32 = arith.constant 0 : i32
    %c0_i32_0 = arith.constant 0 : i32
    return %arg0, %c0_i32 : i32, i32
  }
}

</mosaic_0001>

<llo_original>
// kernel: tpu_custom_call.1
$region0: #{tpu_custom_call.1}
  #allocation0 [shape = 'u32[]', space=smem, size = 0x4, offset = 0x4, fixed_abs, tag = 'smem constant byte address 0x4 - core index']
  #allocation1 [shape = 'u32[144,128]{1,0:T(1,128)}', space=vmem, size = 0x12000, scoped, tag = 'internal scratch']
  #allocation2 [shape = 'f32[1,1]{1,0:T(1,128)S(6)}', space=smem, size = 0x200, scoped, tag = 'scoped memory for tpu_custom_call.1']
  %s0 = inlined_call_operand.vmem [shape: f32[8,4], index: 0, kind: input, shape index: {}]
  %s1 = inlined_call_operand.vmem [shape: f32[8,4], index: 1, kind: input, shape index: {}]
  %s2 = inlined_call_operand.vmem [shape: f32[4,32], index: 2, kind: input, shape index: {}]
  %s3 = inlined_call_operand.vmem [shape: f32[4,32], index: 3, kind: input, shape index: {}]
  %s4 = inlined_call_operand.vmem [shape: f32[32,32], index: 4, kind: input, shape index: {}]
  %s5 = inlined_call_operand.vmem [shape: f32[3,32], index: 5, kind: input, shape index: {}]
  %s6 = inlined_call_operand.<no memory space> [shape: f32[1,1], index: 6, kind: input, shape index: {}]
  %s7 = inlined_call_operand.vmem [shape: f32[8,1], index: 7, kind: output, shape index: {}]
  %s8 = sld [smem:[#allocation0]]
  $region38: #{tpu_custom_call.1} parent=0
    _
  %s10 = ssub.s32 1, %s8
  %s11 = scalar_select 0, %s10, %s8
  %12 = sst [smem:[#allocation2]] %s6
  // Predicated region
  $region2: #{tpu_custom_call.1} parent=0 // pred_check
    _
  $region3: #{tpu_custom_call.1} parent=0 // pred_check_branch
    %14 = sbr.rel (0) target = $region5
  $region4: #{tpu_custom_call.1} parent=0 // pred_region
    _
  $region5: #{tpu_custom_call.1} parent=0 // pred_fallthru
    _
  // Predicated region
  $region6: #{tpu_custom_call.1} parent=0 // pred_check
    _
  $region7: #{tpu_custom_call.1} parent=0 // pred_check_branch
    %16 = sbr.rel (0) target = $region9
  $region8: #{tpu_custom_call.1} parent=0 // pred_region
    _
  $region9: #{tpu_custom_call.1} parent=0 // pred_fallthru
    _
  // Predicated region
  $region10: #{tpu_custom_call.1} parent=0 // pred_check
    _
  $region11: #{tpu_custom_call.1} parent=0 // pred_check_branch
    %18 = sbr.rel (0) target = $region13
  $region12: #{tpu_custom_call.1} parent=0 // pred_region
    _
  $region13: #{tpu_custom_call.1} parent=0 // pred_fallthru
    _
  // Predicated region
  $region14: #{tpu_custom_call.1} parent=0 // pred_check
    _
  $region15: #{tpu_custom_call.1} parent=0 // pred_check_branch
    %20 = sbr.rel (0) target = $region17
  $region16: #{tpu_custom_call.1} parent=0 // pred_region
    _
  $region17: #{tpu_custom_call.1} parent=0 // pred_fallthru
    _
  // Predicated region
  $region18: #{tpu_custom_call.1} parent=0 // pred_check
    _
  $region19: #{tpu_custom_call.1} parent=0 // pred_check_branch
    %22 = sbr.rel (0) target = $region21
  $region20: #{tpu_custom_call.1} parent=0 // pred_region
    _
  $region21: #{tpu_custom_call.1} parent=0 // pred_fallthru
    _
  // Predicated region
  $region22: #{tpu_custom_call.1} parent=0 // pred_check
    _
  $region23: #{tpu_custom_call.1} parent=0 // pred_check_branch
    %24 = sbr.rel (0) target = $region25
  $region24: #{tpu_custom_call.1} parent=0 // pred_region
    _
  $region25: #{tpu_custom_call.1} parent=0 // pred_fallthru
    _
  // Predicated region
  $region26: #{tpu_custom_call.1} parent=0 // pred_check
    _
  $region27: #{tpu_custom_call.1} parent=0 // pred_check_branch
    %26 = sbr.rel (0) target = $region29
  $region28: #{tpu_custom_call.1} parent=0 // pred_region
    _
  $region29: #{tpu_custom_call.1} parent=0 // pred_fallthru
    _
  %v27 = vld [vmem:[%s5] sm:$0x1]
  %v28 = vld [vmem:[%s5 + $0x1] sm:$0x1]
  %v29 = vld [vmem:[%s5 + $0x2] sm:$0x1]
  %v30 = vld [vmem:[%s0] sm:$0xff]
  %v31 = vld [vmem:[%s2] sm:$0xf]
  %v32 = vld [vmem:[%s1] sm:$0xff]
  %v33 = vld [vmem:[%s3] sm:$0xf]
  %vm34 = vcmask 31744
  %v36 = vsel %vm34, %v32, 0
  %vm38 = vcmask 1043456
  %v40 = vsel %vm38, %v33, 0
  %42 = vmatprep.subr.mxu0 0.0
  %43 = vmatpush1.msra.mxu0 %v40
  %44 = vmatprep.subr.mxu0 0.0
  %45 = vmatpush1.msra.mxu0 0.0
  %46 = vmatprep.subr.mxu0 0.0
  %47 = vmatpush1.msra.mxu0 0.0
  %48 = vmatprep.subr.mxu0 0.0
  %49 = vmatpush1.msra.mxu0 0.0
  %50 = vmatprep.subr.mxu0 0.0
  %51 = vmatpush1.msra.mxu0 0.0
  %52 = vmatprep.subr.mxu0 0.0
  %53 = vmatpush1.msra.mxu0 0.0
  %54 = vmatprep.subr.mxu0 0.0
  %55 = vmatpush1.msra.mxu0 0.0
  %56 = vmatprep.subr.mxu0 0.0
  %57 = vmatpush1.msra.mxu0 0.0
  %58 = vmatprep.subr.mxu0 0.0
  %59 = vmatpush1.msra.mxu0 0.0
  %60 = vmatprep.subr.mxu0 0.0
  %61 = vmatpush1.msra.mxu0 0.0
  %62 = vmatprep.subr.mxu0 0.0
  %63 = vmatpush1.msra.mxu0 0.0
  %64 = vmatprep.subr.mxu0 0.0
  %65 = vmatpush1.msra.mxu0 0.0
  %66 = vmatprep.subr.mxu0 0.0
  %67 = vmatpush1.msra.mxu0 0.0
  %68 = vmatprep.subr.mxu0 0.0
  %69 = vmatpush1.msra.mxu0 0.0
  %70 = vmatprep.subr.mxu0 0.0
  %71 = vmatpush1.msra.mxu0 0.0
  %72 = vmatprep.subr.mxu0 0.0
  %73 = vmatpush1.msra.mxu0 0.0
  %74 = vmatprep.subr.mxu0 0.0
  %75 = vmatpush1.msra.mxu0 0.0
  %76 = vmatprep.subr.mxu0 0.0
  %77 = vmatpush1.msra.mxu0 0.0
  %78 = vmatprep.subr.mxu0 0.0
  %79 = vmatpush1.msra.mxu0 0.0
  %80 = vmatprep.subr.mxu0 0.0
  %81 = vmatpush1.msra.mxu0 0.0
  %82 = vmatprep.subr.mxu0 0.0
  %83 = vmatpush1.msra.mxu0 0.0
  %84 = vmatprep.subr.mxu0 0.0
  %85 = vmatpush1.msra.mxu0 0.0
  %86 = vmatprep.subr.mxu0 0.0
  %87 = vmatpush1.msra.mxu0 0.0
  %88 = vmatprep.subr.mxu0 0.0
  %89 = vmatpush1.msra.mxu0 0.0
  %90 = vmatprep.subr.mxu0 0.0
  %91 = vmatpush1.msra.mxu0 0.0
  %92 = vmatprep.subr.mxu0 0.0
  %93 = vmatpush1.msra.mxu0 0.0
  %94 = vmatprep.subr.mxu0 0.0
  %95 = vmatpush1.msra.mxu0 0.0
  %96 = vmatprep.subr.mxu0 0.0
  %97 = vmatpush1.msra.mxu0 0.0
  %98 = vmatprep.subr.mxu0 0.0
  %99 = vmatpush1.msra.mxu0 0.0
  %100 = vmatprep.subr.mxu0 0.0
  %101 = vmatpush1.msra.mxu0 0.0
  %102 = vmatprep.subr.mxu0 0.0
  %103 = vmatpush1.msra.mxu0 0.0
  %104 = vmatprep.subr.mxu0 0.0
  %105 = vmatpush1.msra.mxu0 0.0
  %106 = vmatprep.mubr.f32.mxu0 0.0
  %107 = vmatmul.mubr.f32.gmra.mrb[0].mxu0 %v36
  %v108 = vpop.f32.mrb[0].mxu0
  %v109 = vadd.f32 0.0, %v108
  %v110 = vpop.f32.mrb[0].mxu0
  %111 = vdwg.mxu0
  %v113 = vsel %vm34, %v30, 0
  %v116 = vsel %vm38, %v31, 0
  %118 = vmatprep.subr.mxu0 0.0
  %119 = vmatpush1.msra.mxu0 %v116
  %120 = vmatprep.subr.mxu0 0.0
  %121 = vmatpush1.msra.mxu0 0.0
  %122 = vmatprep.subr.mxu0 0.0
  %123 = vmatpush1.msra.mxu0 0.0
  %124 = vmatprep.subr.mxu0 0.0
  %125 = vmatpush1.msra.mxu0 0.0
  %126 = vmatprep.subr.mxu0 0.0
  %127 = vmatpush1.msra.mxu0 0.0
  %128 = vmatprep.subr.mxu0 0.0
  %129 = vmatpush1.msra.mxu0 0.0
  %130 = vmatprep.subr.mxu0 0.0
  %131 = vmatpush1.msra.mxu0 0.0
  %132 = vmatprep.subr.mxu0 0.0
  %133 = vmatpush1.msra.mxu0 0.0
  %134 = vmatprep.subr.mxu0 0.0
  %135 = vmatpush1.msra.mxu0 0.0
  %136 = vmatprep.subr.mxu0 0.0
  %137 = vmatpush1.msra.mxu0 0.0
  %138 = vmatprep.subr.mxu0 0.0
  %139 = vmatpush1.msra.mxu0 0.0
  %140 = vmatprep.subr.mxu0 0.0
  %141 = vmatpush1.msra.mxu0 0.0
  %142 = vmatprep.subr.mxu0 0.0
  %143 = vmatpush1.msra.mxu0 0.0
  %144 = vmatprep.subr.mxu0 0.0
  %145 = vmatpush1.msra.mxu0 0.0
  %146 = vmatprep.subr.mxu0 0.0
  %147 = vmatpush1.msra.mxu0 0.0
  %148 = vmatprep.subr.mxu0 0.0
  %149 = vmatpush1.msra.mxu0 0.0
  %150 = vmatprep.subr.mxu0 0.0
  %151 = vmatpush1.msra.mxu0 0.0
  %152 = vmatprep.subr.mxu0 0.0
  %153 = vmatpush1.msra.mxu0 0.0
  %154 = vmatprep.subr.mxu0 0.0
  %155 = vmatpush1.msra.mxu0 0.0
  %156 = vmatprep.subr.mxu0 0.0
  %157 = vmatpush1.msra.mxu0 0.0
  %158 = vmatprep.subr.mxu0 0.0
  %159 = vmatpush1.msra.mxu0 0.0
  %160 = vmatprep.subr.mxu0 0.0
  %161 = vmatpush1.msra.mxu0 0.0
  %162 = vmatprep.subr.mxu0 0.0
  %163 = vmatpush1.msra.mxu0 0.0
  %164 = vmatprep.subr.mxu0 0.0
  %165 = vmatpush1.msra.mxu0 0.0
  %166 = vmatprep.subr.mxu0 0.0
  %167 = vmatpush1.msra.mxu0 0.0
  %168 = vmatprep.subr.mxu0 0.0
  %169 = vmatpush1.msra.mxu0 0.0
  %170 = vmatprep.subr.mxu0 0.0
  %171 = vmatpush1.msra.mxu0 0.0
  %172 = vmatprep.subr.mxu0 0.0
  %173 = vmatpush1.msra.mxu0 0.0
  %174 = vmatprep.subr.mxu0 0.0
  %175 = vmatpush1.msra.mxu0 0.0
  %176 = vmatprep.subr.mxu0 0.0
  %177 = vmatpush1.msra.mxu0 0.0
  %178 = vmatprep.subr.mxu0 0.0
  %179 = vmatpush1.msra.mxu0 0.0
  %180 = vmatprep.subr.mxu0 0.0
  %181 = vmatpush1.msra.mxu0 0.0
  %182 = vmatprep.mubr.f32.mxu0 0.0
  %183 = vmatmul.mubr.f32.gmra.mrb[0].mxu0 %v113
  %v184 = vpop.f32.mrb[0].mxu0
  %v185 = vadd.f32 %v109, %v184
  %v186 = vpop.f32.mrb[0].mxu0
  %187 = vdwg.mxu0
  %v188 = vlaneseq
  %v189 = vshrl.u32 %v188, 7
  %v190 = vsub.s32 0, %v189
  %v191 = vrot.slane %v27, %v190
  %v192 = vadd.f32 %v185, %v191
  %v193 = vmax.f32 %v192, 0.0
  %v194 = vld [vmem:[%s4] sm:$0xff]
  %v195 = vld [vmem:[%s4 + $0x8] sm:$0xff]
  %v196 = vld [vmem:[%s4 + $0x10] sm:$0xff]
  %v197 = vld [vmem:[%s4 + $0x18] sm:$0xff]
  %v198 = vlaneseq
  %v199 = vshrl.u32 %v198, 7
  %v200 = vsub.s32 0, %v199
  %v201 = vrot.slane %v28, %v200
  %vm202 = vcmask 261120
  %v204 = vsel %vm202, %v193, 0
  %206 = vmatprep.subr.mxu0 0.0
  %207 = vmatpush1.msra.mxu0 %v194
  %208 = vmatprep.subr.mxu0 0.0
  %209 = vmatpush1.msra.mxu0 %v195
  %210 = vmatprep.subr.mxu0 0.0
  %211 = vmatpush1.msra.mxu0 %v196
  %212 = vmatprep.subr.mxu0 0.0
  %213 = vmatpush1.msra.mxu0 %v197
  %214 = vmatprep.subr.mxu0 0.0
  %215 = vmatpush1.msra.mxu0 0.0
  %216 = vmatprep.subr.mxu0 0.0
  %217 = vmatpush1.msra.mxu0 0.0
  %218 = vmatprep.subr.mxu0 0.0
  %219 = vmatpush1.msra.mxu0 0.0
  %220 = vmatprep.subr.mxu0 0.0
  %221 = vmatpush1.msra.mxu0 0.0
  %222 = vmatprep.subr.mxu0 0.0
  %223 = vmatpush1.msra.mxu0 0.0
  %224 = vmatprep.subr.mxu0 0.0
  %225 = vmatpush1.msra.mxu0 0.0
  %226 = vmatprep.subr.mxu0 0.0
  %227 = vmatpush1.msra.mxu0 0.0
  %228 = vmatprep.subr.mxu0 0.0
  %229 = vmatpush1.msra.mxu0 0.0
  %230 = vmatprep.subr.mxu0 0.0
  %231 = vmatpush1.msra.mxu0 0.0
  %232 = vmatprep.subr.mxu0 0.0
  %233 = vmatpush1.msra.mxu0 0.0
  %234 = vmatprep.subr.mxu0 0.0
  %235 = vmatpush1.msra.mxu0 0.0
  %236 = vmatprep.subr.mxu0 0.0
  %237 = vmatpush1.msra.mxu0 0.0
  %238 = vmatprep.subr.mxu0 0.0
  %239 = vmatpush1.msra.mxu0 0.0
  %240 = vmatprep.subr.mxu0 0.0
  %241 = vmatpush1.msra.mxu0 0.0
  %242 = vmatprep.subr.mxu0 0.0
  %243 = vmatpush1.msra.mxu0 0.0
  %244 = vmatprep.subr.mxu0 0.0
  %245 = vmatpush1.msra.mxu0 0.0
  %246 = vmatprep.subr.mxu0 0.0
  %247 = vmatpush1.msra.mxu0 0.0
  %248 = vmatprep.subr.mxu0 0.0
  %249 = vmatpush1.msra.mxu0 0.0
  %250 = vmatprep.subr.mxu0 0.0
  %251 = vmatpush1.msra.mxu0 0.0
  %252 = vmatprep.subr.mxu0 0.0
  %253 = vmatpush1.msra.mxu0 0.0
  %254 = vmatprep.subr.mxu0 0.0
  %255 = vmatpush1.msra.mxu0 0.0
  %256 = vmatprep.subr.mxu0 0.0
  %257 = vmatpush1.msra.mxu0 0.0
  %258 = vmatprep.subr.mxu0 0.0
  %259 = vmatpush1.msra.mxu0 0.0
  %260 = vmatprep.subr.mxu0 0.0
  %261 = vmatpush1.msra.mxu0 0.0
  %262 = vmatprep.subr.mxu0 0.0
  %263 = vmatpush1.msra.mxu0 0.0
  %264 = vmatprep.subr.mxu0 0.0
  %265 = vmatpush1.msra.mxu0 0.0
  %266 = vmatprep.subr.mxu0 0.0
  %267 = vmatpush1.msra.mxu0 0.0
  %268 = vmatprep.subr.mxu0 0.0
  %269 = vmatpush1.msra.mxu0 0.0
  %270 = vmatprep.mubr.f32.mxu0 0.0
  %271 = vmatmul.mubr.f32.gmra.mrb[0].mxu0 %v204
  %v272 = vpop.f32.mrb[0].mxu0
  %v273 = vadd.f32 %v201, %v272
  %v274 = vpop.f32.mrb[0].mxu0
  %275 = vdwg.mxu0
  %v276 = vmax.f32 %v273, 0.0
  %v277 = vlaneseq
  %v278 = vshrl.u32 %v277, 7
  %v279 = vsub.s32 0, %v278
  %v280 = vrot.slane %v29, %v279
  %v281 = vmul.f32 %v276, %v280
  %v282 = vsel %vm202, %v281, 0.0
  %283 = vadd.xlane.f32.xlu0 %v282
  %v284 = vpop.xlane.xlu0 %283
  %s285 = sld [smem:[#allocation2]]
  %v286 = vstv %s285
  %v287 = vadd.f32 %v284, %v286
  %vm288 = vcmask 7168
  %289 = vst.msk [vmem:[%s7] sm:$0xff] %vm288, %v287
  // Predicated region
  $region30: #{tpu_custom_call.1} parent=0 // pred_check
    _
  $region31: #{tpu_custom_call.1} parent=0 // pred_check_branch
    %291 = sbr.rel (0) target = $region33
  $region32: #{tpu_custom_call.1} parent=0 // pred_region
    _
  $region33: #{tpu_custom_call.1} parent=0 // pred_fallthru
    _
  // Predicated region
  $region34: #{tpu_custom_call.1} parent=0 // pred_check
    _
  $region35: #{tpu_custom_call.1} parent=0 // pred_check_branch
    %293 = sbr.rel (0) target = $region37
  $region36: #{tpu_custom_call.1} parent=0 // pred_region
    _
  $region37: #{tpu_custom_call.1} parent=0 // pred_fallthru
    _

</llo_original>
